<compile_context>
chip_gen: v7x
topology: tpu7x:2x2x1
jax: 0.10.0
libtpu: 0.0.40
codegen_flags: <defaults>
</compile_context>

<pallas_src>
import jax
import jax.numpy as jnp
from jax.experimental import pallas as pl
from jax.experimental.pallas import tpu as pltpu


def _attention_kernel(enc_ref, dec_ref, wenc_ref, v_ref, o_ref):
    # enc_ref : [TB, S, E]  encoder outputs for this batch tile (f32 or bf16)
    # dec_ref : [TB, S, D]  precomputed h @ W_dec.T + bias, row-gathered (f32)
    # wenc_ref: [E, D]      encoder half of attn weight, transposed (f32 or bf16)
    # v_ref   : [1, D]      v weight row (f32)
    # o_ref   : [TB, S]     softmax(attention), lane-dense (S on lanes)
    TB, S, E = enc_ref.shape
    D = wenc_ref.shape[1]

    enc2d = enc_ref[...].reshape(TB * S, E)
    dec2d = dec_ref[...].reshape(TB * S, D)

    # energy = tanh(enc @ W_enc + (h @ W_dec + b))   -- MXU matmul, f32 accumulate.
    z = jnp.tanh(
        jnp.dot(enc2d, wenc_ref[...], preferred_element_type=jnp.float32) + dec2d
    )  # [TB*S, D] f32

    # v projection: VPU multiply + lane reduce (avoid an N=1 MXU matmul).
    zv = z * v_ref[...]                                   # [TB*S, D]
    scores = jnp.sum(zv.reshape(TB, S, D), axis=-1)       # [TB, S], S on lanes

    # softmax over src_len, lane-major.
    m = jnp.max(scores, axis=-1, keepdims=True)
    e = jnp.exp(scores - m)
    denom = jnp.sum(e, axis=-1, keepdims=True)
    p = e * pl.reciprocal(denom, approx=True)             # EUP vrcp slot

    o_ref[...] = p.astype(o_ref.dtype)


def _choose_batch_tile(B, S, target_rows=1024):
    """Pick a batch tile so each grid step sees ~target_rows (TB*S) sublane rows.

    Keeps the whole src_len inside one block (softmax stays local).  When the
    batch is split (grid > 1), TB is a multiple of 8 so the lane-dense output
    block (TB, S) satisfies the (8, 128)/full-dim tiling rule, and the batch is
    zero-padded up to a multiple of TB (padded rows are sliced off afterwards).
    Multiple grid steps also let v7x's two TensorCores share the work.
    """
    tb = max(1, min(B, target_rows // max(S, 1)))
    if tb < B:
        tb = max(8, (tb // 8) * 8)
    b_pad = -(-B // tb) * tb
    return tb, b_pad


def attention_pallas(hidden, encoder_outputs, attn_w, attn_b, v_w, *, matmul_dtype=None):
    """hidden: [L, B, D], encoder_outputs: [B, S, E].
    attn_w: [D, D+E] (torch Linear weight; first D input cols act on hidden),
    attn_b: [D], v_w: [1, D].
    matmul_dtype: optionally cast the MXU operands (encoder block + W_enc) to
    bf16 on v6e/v7x; accumulation and all elementwise math stay f32."""
    B, S, E = encoder_outputs.shape
    D = attn_w.shape[0]
    assert attn_w.shape[1] == D + E

    # --- split the concat-Linear: cat((hidden, enc), dim=2) => first D columns
    #     of attn_w multiply the hidden part, the remaining E the encoder part.
    w_dec = attn_w[:, :D]                      # [D, D]
    w_enc_t = attn_w[:, D:].T                  # [E, D]
    v_row = v_w.reshape(1, D).astype(jnp.float32)

    # --- decoder-side term (tiny: B x D), computed once in plain JAX.
    h2 = hidden[2]                             # [B, D]   (hidden[2:3] squeezed)
    dec_all = h2 @ w_dec.T + attn_b            # [B, D]
    # torch's hidden[2:3].repeat(1, S, 1).reshape(B, S, -1) interleaves batch
    # rows: row (b, s) uses h2[(b*S + s) % B].  Reproduce exactly.
    row_idx = jnp.arange(B * S) % B
    dec_term = dec_all[row_idx].reshape(B, S, D).astype(jnp.float32)

    enc = encoder_outputs
    if matmul_dtype is not None:
        enc = enc.astype(matmul_dtype)
        w_enc_t = w_enc_t.astype(matmul_dtype)

    tb, b_pad = _choose_batch_tile(B, S)
    if b_pad != B:
        pad = b_pad - B
        enc = jnp.pad(enc, ((0, pad), (0, 0), (0, 0)))
        dec_term = jnp.pad(dec_term, ((0, pad), (0, 0), (0, 0)))
    grid = (b_pad // tb,)

    out = pl.pallas_call(
        _attention_kernel,
        out_shape=jax.ShapeDtypeStruct((b_pad, S), jnp.float32),
        grid_spec=pltpu.PrefetchScalarGridSpec(
            num_scalar_prefetch=0,
            grid=grid,
            in_specs=[
                pl.BlockSpec((tb, S, E), lambda i: (i, 0, 0)),
                pl.BlockSpec((tb, S, D), lambda i: (i, 0, 0)),
                pl.BlockSpec((E, D), lambda i: (0, 0)),
                pl.BlockSpec((1, D), lambda i: (0, 0)),
            ],
            out_specs=pl.BlockSpec((tb, S), lambda i: (i, 0)),
        ),
        compiler_params=pltpu.CompilerParams(
            dimension_semantics=("parallel",),
        ),
    )(enc, dec_term, w_enc_t, v_row)

    return out[:B]  # [B, S]


def attention_ref(hidden, encoder_outputs, attn_w, attn_b, v_w):
    """Plain-JAX reference mirroring the torch module exactly."""
    B, S, E = encoder_outputs.shape
    h2 = hidden[2]
    h_rep = jnp.tile(h2, (S, 1)).reshape(B, S, -1)
    x = jnp.concatenate([h_rep, encoder_outputs], axis=-1)
    energy = jnp.tanh(x @ attn_w.T + attn_b)
    attention = (energy @ v_w.T)[..., 0]
    return jax.nn.softmax(attention, axis=1)


if __name__ == "__main__":
    # Small, module-consistent shapes.
    enc_hid_dim = 32
    dec_hid_dim = 32
    batch = 2
    src_len = 8
    num_layers = 4  # forward uses hidden[2:3], so need >= 3 layers

    key = jax.random.PRNGKey(0)
    k_hid, k_enc, k_w1, k_b1, k_v = jax.random.split(key, 5)

    hidden = jax.random.normal(k_hid, (num_layers, batch, dec_hid_dim), jnp.float32)
    encoder_outputs = jax.random.normal(k_enc, (batch, src_len, enc_hid_dim), jnp.float32)

    fan_in = enc_hid_dim + dec_hid_dim
    attn_w = jax.random.normal(k_w1, (dec_hid_dim, fan_in), jnp.float32) * (1.0 / fan_in ** 0.5)
    attn_b = jax.random.normal(k_b1, (dec_hid_dim,), jnp.float32) * 0.01
    v_w = jax.random.normal(k_v, (1, dec_hid_dim), jnp.float32) * (1.0 / dec_hid_dim ** 0.5)

    ref = attention_ref(hidden, encoder_outputs, attn_w, attn_b, v_w)

    # f32 MXU-operand path (exact; the v5e-friendly default).
    out = attention_pallas(hidden, encoder_outputs, attn_w, attn_b, v_w)
    out = jax.block_until_ready(out)
    assert out.shape == (batch, src_len)
    assert jnp.allclose(out, ref, atol=5e-3, rtol=5e-3), (out, ref)
    assert jnp.allclose(jnp.sum(out, axis=1), 1.0, atol=1e-2)

    # bf16 MXU-operand path (v6e / v7x recommendation): bf16 inputs, f32
    # accumulation, f32 tanh/softmax.  Looser tolerance due to bf16 rounding.
    out_bf16 = attention_pallas(
        hidden, encoder_outputs, attn_w, attn_b, v_w, matmul_dtype=jnp.bfloat16
    )
    out_bf16 = jax.block_until_ready(out_bf16)
    assert out_bf16.shape == (batch, src_len)
    assert jnp.allclose(out_bf16, ref, atol=5e-2), (out_bf16, ref)

    print("KERNEL_OK")
</pallas_src>

<mosaic_0001>
module attributes {stable_mosaic.version = 11 : i64} {
  func.func @_attention_kernel(%arg0: i32, %arg1: memref<2x8x32xf32, #tpu.memory_space<vmem>>, %arg2: memref<2x8x32xf32, #tpu.memory_space<vmem>>, %arg3: memref<32x32xf32, #tpu.memory_space<vmem>>, %arg4: memref<1x32xf32, #tpu.memory_space<vmem>>, %arg5: memref<2x8xf32, #tpu.memory_space<vmem>>) attributes {dimension_semantics = [#tpu.dimension_semantics<parallel>], iteration_bounds = array<i64: 1>, scalar_prefetch = 0 : i64, scratch_operands = 0 : i64, tpu.core_type = #tpu.core_type<tc>, window_params = [{transform_indices = @transform_0, window_bounds = array<i64: 2, 8, 32>}, {transform_indices = @transform_1, window_bounds = array<i64: 2, 8, 32>}, {pipeline_mode = #tpu.pipeline_mode<synchronous>, transform_indices = @transform_2, window_bounds = array<i64: 32, 32>}, {pipeline_mode = #tpu.pipeline_mode<synchronous>, transform_indices = @transform_3, window_bounds = array<i64: 1, 32>}, {transform_indices = @transform_4, window_bounds = array<i64: 2, 8>}]} {
    %c0 = arith.constant 0 : index
    %c0_0 = arith.constant 0 : index
    %c0_1 = arith.constant 0 : index
    %0 = vector.load %arg1[%c0, %c0_0, %c0_1] : memref<2x8x32xf32, #tpu.memory_space<vmem>>, vector<2x8x32xf32>
    %1 = vector.shape_cast %0 : vector<2x8x32xf32> to vector<16x32xf32>
    %c0_2 = arith.constant 0 : index
    %c0_3 = arith.constant 0 : index
    %c0_4 = arith.constant 0 : index
    %2 = vector.load %arg2[%c0_2, %c0_3, %c0_4] : memref<2x8x32xf32, #tpu.memory_space<vmem>>, vector<2x8x32xf32>
    %3 = vector.shape_cast %2 : vector<2x8x32xf32> to vector<16x32xf32>
    %c0_5 = arith.constant 0 : index
    %c0_6 = arith.constant 0 : index
    %4 = vector.load %arg3[%c0_5, %c0_6] : memref<32x32xf32, #tpu.memory_space<vmem>>, vector<32x32xf32>
    %cst = arith.constant dense<0.000000e+00> : vector<16x32xf32>
    %5 = tpu.matmul %1, %4, %cst {dimension_numbers = #tpu.dot_dimension_numbers<[1], [0], [0], [1], [0, 0, 1, 1], [], []>} : vector<16x32xf32>, vector<32x32xf32>, vector<16x32xf32> -> vector<16x32xf32>
    %6 = arith.addf %5, %3 : vector<16x32xf32>
    %7 = math.tanh %6 : vector<16x32xf32>
    %c0_7 = arith.constant 0 : index
    %c0_8 = arith.constant 0 : index
    %8 = vector.load %arg4[%c0_7, %c0_8] : memref<1x32xf32, #tpu.memory_space<vmem>>, vector<1x32xf32>
    %9 = vector.broadcast %8 : vector<1x32xf32> to vector<16x32xf32>
    %10 = arith.mulf %7, %9 : vector<16x32xf32>
    %11 = vector.shape_cast %10 : vector<16x32xf32> to vector<2x8x32xf32>
    %cst_9 = arith.constant dense<0.000000e+00> : vector<2x8xf32>
    %12 = vector.multi_reduction <add>, %11, %cst_9 [2] : vector<2x8x32xf32> to vector<2x8xf32>
    %cst_10 = arith.constant dense<0xFF800000> : vector<2xf32>
    %13 = vector.multi_reduction <maximumf>, %12, %cst_10 [1] : vector<2x8xf32> to vector<2xf32>
    %14 = vector.shape_cast %13 : vector<2xf32> to vector<2x1xf32>
    %15 = vector.broadcast %14 : vector<2x1xf32> to vector<2x8xf32>
    %16 = arith.subf %12, %15 : vector<2x8xf32>
    %17 = math.exp %16 : vector<2x8xf32>
    %cst_11 = arith.constant dense<0.000000e+00> : vector<2xf32>
    %18 = vector.multi_reduction <add>, %17, %cst_11 [1] : vector<2x8xf32> to vector<2xf32>
    %19 = vector.shape_cast %18 : vector<2xf32> to vector<2x1xf32>
    %20 = tpu.reciprocal %19 {approx = true} : vector<2x1xf32> -> vector<2x1xf32>
    %21 = vector.broadcast %20 : vector<2x1xf32> to vector<2x8xf32>
    %22 = arith.mulf %17, %21 : vector<2x8xf32>
    %c0_12 = arith.constant 0 : index
    %c0_13 = arith.constant 0 : index
    %23 = vector.load %arg5[%c0_12, %c0_13] : memref<2x8xf32, #tpu.memory_space<vmem>>, vector<2x8xf32>
    tpu.vector_store %arg5[%c0_12, %c0_13], %22 {strides = array<i32>} : memref<2x8xf32, #tpu.memory_space<vmem>>, vector<2x8xf32>,
    return
  }
  func.func @transform_0(%arg0: i32) -> (i32, i32, i32) {
    %c0_i32 = arith.constant 0 : i32
    %c0_i32_0 = arith.constant 0 : i32
    %c0_i32_1 = arith.constant 0 : i32
    return %arg0, %c0_i32, %c0_i32_0 : i32, i32, i32
  }
  func.func @transform_1(%arg0: i32) -> (i32, i32, i32) {
    %c0_i32 = arith.constant 0 : i32
    %c0_i32_0 = arith.constant 0 : i32
    %c0_i32_1 = arith.constant 0 : i32
    return %arg0, %c0_i32, %c0_i32_0 : i32, i32, i32
  }
  func.func @transform_2(%arg0: i32) -> (i32, i32) {
    %c0_i32 = arith.constant 0 : i32
    %c0_i32_0 = arith.constant 0 : i32
    %c0_i32_1 = arith.constant 0 : i32
    return %c0_i32, %c0_i32_0 : i32, i32
  }
  func.func @transform_3(%arg0: i32) -> (i32, i32) {
    %c0_i32 = arith.constant 0 : i32
    %c0_i32_0 = arith.constant 0 : i32
    %c0_i32_1 = arith.constant 0 : i32
    return %c0_i32, %c0_i32_0 : i32, i32
  }
  func.func @transform_4(%arg0: i32) -> (i32, i32) {
    %c0_i32 = arith.constant 0 : i32
    %c0_i32_0 = arith.constant 0 : i32
    return %arg0, %c0_i32 : i32, i32
  }
}

</mosaic_0001>

<llo_original>
// kernel: tpu_custom_call.1
$region0: #{tpu_custom_call.1}
  #allocation0 [shape = 'u32[]', space=smem, size = 0x4, offset = 0x4, fixed_abs, tag = 'smem constant byte address 0x4 - core index']
  #allocation1 [shape = 'u32[144,128]{1,0:T(1,128)}', space=vmem, size = 0x12000, scoped, tag = 'internal scratch']
  %s0 = inlined_call_operand.hbm [shape: f32[2,8,32], index: 0, kind: input, shape index: {}]
  %s1 = inlined_call_operand.hbm [shape: f32[2,8,32], index: 1, kind: input, shape index: {}]
  %s2 = inlined_call_operand.hbm [shape: f32[32,32], index: 2, kind: input, shape index: {}]
  %s3 = inlined_call_operand.vmem [shape: f32[1,32], index: 3, kind: input, shape index: {}]
  %s4 = inlined_call_operand.hbm [shape: f32[2,8], index: 4, kind: output, shape index: {}]
  %s5 = sld [smem:[#allocation0]]
  $region38: #{tpu_custom_call.1} parent=0
    _
  %s7 = ssub.s32 1, %s5
  %s8 = scalar_select 0, %s7, %s5
  $region1: #{tpu_custom_call.1} parent=0
    #allocation2 [shape = 'u8[8192]{0}', space=vmem, size = 0x2000, scoped, tag = 'input window, operand 0, single buffered']
    #allocation3 [shape = 's32[1]{0}', space=sflag, size = 0x4, scoped, tag = 'scoped memory for tpu_custom_call.1']
    #allocation4 [shape = 's32[1]{0}', space=sflag, size = 0x4, scoped, tag = 'scoped memory for tpu_custom_call.1']
    #allocation5 [shape = 'u8[8192]{0}', space=vmem, size = 0x2000, scoped, tag = 'input window, operand 1, single buffered']
    #allocation6 [shape = 's32[1]{0}', space=sflag, size = 0x4, scoped, tag = 'scoped memory for tpu_custom_call.1']
    #allocation7 [shape = 'u8[16384]{0}', space=vmem, size = 0x4000, scoped, tag = 'input window, operand 2, single buffered']
    #allocation8 [shape = 'u8[1024]{0}', space=vmem, size = 0x400, scoped, tag = 'output window, operand 0, single buffered']
    %9 = vsyncpa [#allocation3], 0
    %10 = vsyncpa [#allocation6], 0
    %11 = vsyncpa [#allocation4], 0
    // Predicated region
    $region2: #{tpu_custom_call.1} parent=1 // pred_check
      _
    $region3: #{tpu_custom_call.1} parent=1 // pred_check_branch
      %13 = sbr.rel (0) target = $region5
    $region4: #{tpu_custom_call.1} parent=1 // pred_region
      %s15 = ssub.s32 256, 256
      %16 = vsyncadd [#allocation3], %s15
      %s17 = sshll.u32 [#allocation2], 4
      %s18 = int_to_ptr.vmem [resolvable:$true] %s17
      %23 = dma.hbm_to_vmem [thread:$0]  %s0, 256, %s18, [#allocation3], 128, 128, 8
    $region5: #{tpu_custom_call.1} parent=1 // pred_fallthru
      _
    // Predicated region
    $region6: #{tpu_custom_call.1} parent=1 // pred_check
      _
    $region7: #{tpu_custom_call.1} parent=1 // pred_check_branch
      %25 = sbr.rel (0) target = $region9
    $region8: #{tpu_custom_call.1} parent=1 // pred_region
      %s27 = ssub.s32 256, 256
      %28 = vsyncadd [#allocation6], %s27
      %s29 = sshll.u32 [#allocation5], 4
      %s30 = int_to_ptr.vmem [resolvable:$true] %s29
      %35 = dma.hbm_to_vmem [thread:$0]  %s1, 256, %s30, [#allocation6], 128, 128, 8
    $region9: #{tpu_custom_call.1} parent=1 // pred_fallthru
      _
    // Predicated region
    $region10: #{tpu_custom_call.1} parent=1 // pred_check
      _
    $region11: #{tpu_custom_call.1} parent=1 // pred_check_branch
      %37 = sbr.rel (0) target = $region13
    $region12: #{tpu_custom_call.1} parent=1 // pred_region
      %s39 = ssub.s32 512, 512
      %40 = vsyncadd [#allocation6], %s39
      %s41 = sshll.u32 [#allocation7], 4
      %s42 = int_to_ptr.vmem [resolvable:$true] %s41
      %47 = dma.hbm_to_vmem [thread:$0]  %s2, 512, %s42, [#allocation6], 128, 128, 8
    $region13: #{tpu_custom_call.1} parent=1 // pred_fallthru
      _
    // Predicated region
    $region14: #{tpu_custom_call.1} parent=1 // pred_check
      _
    $region15: #{tpu_custom_call.1} parent=1 // pred_check_branch
      %49 = sbr.rel (0) target = $region17
    $region16: #{tpu_custom_call.1} parent=1 // pred_region
      _
    $region17: #{tpu_custom_call.1} parent=1 // pred_fallthru
      _
    // Predicated region
    $region18: #{tpu_custom_call.1} parent=1 // pred_check
      _
    $region19: #{tpu_custom_call.1} parent=1 // pred_check_branch
      %51 = sbr.rel (0) target = $region21
    $region20: #{tpu_custom_call.1} parent=1 // pred_region
      %52 = dma.done [#allocation3], 256
    $region21: #{tpu_custom_call.1} parent=1 // pred_fallthru
      _
    // Predicated region
    $region22: #{tpu_custom_call.1} parent=1 // pred_check
      _
    $region23: #{tpu_custom_call.1} parent=1 // pred_check_branch
      %54 = sbr.rel (0) target = $region25
    $region24: #{tpu_custom_call.1} parent=1 // pred_region
      %55 = dma.done [#allocation6], 256
    $region25: #{tpu_custom_call.1} parent=1 // pred_fallthru
      _
    // Predicated region
    $region26: #{tpu_custom_call.1} parent=1 // pred_check
      _
    $region27: #{tpu_custom_call.1} parent=1 // pred_check_branch
      %57 = sbr.rel (0) target = $region29
    $region28: #{tpu_custom_call.1} parent=1 // pred_region
      %58 = dma.done [#allocation6], 512
    $region29: #{tpu_custom_call.1} parent=1 // pred_fallthru
      _
    %v59 = vld [vmem:[#allocation2] sm:$0xff]
    %v60 = vld [vmem:[#allocation2 + $0x8] sm:$0xff]
    %v61 = vld [vmem:[#allocation5] sm:$0xff]
    %v62 = vld [vmem:[#allocation5 + $0x8] sm:$0xff]
    %v63 = vld [vmem:[#allocation7] sm:$0xff]
    %v64 = vld [vmem:[#allocation7 + $0x8] sm:$0xff]
    %v65 = vld [vmem:[#allocation7 + $0x10] sm:$0xff]
    %v66 = vld [vmem:[#allocation7 + $0x18] sm:$0xff]
    %vm67 = vcmask 261120
    %v69 = vsel %vm67, %v59, 0
    %v72 = vsel %vm67, %v60, 0
    %74 = vmatprep.subr.mxu0 0.0
    %75 = vmatpush1.msra.mxu0 %v63
    %76 = vmatprep.subr.mxu0 0.0
    %77 = vmatpush1.msra.mxu0 %v64
    %78 = vmatprep.subr.mxu0 0.0
    %79 = vmatpush1.msra.mxu0 %v65
    %80 = vmatprep.subr.mxu0 0.0
    %81 = vmatpush1.msra.mxu0 %v66
    %82 = vmatprep.subr.mxu0 0.0
    %83 = vmatpush1.msra.mxu0 0.0
    %84 = vmatprep.subr.mxu0 0.0
    %85 = vmatpush1.msra.mxu0 0.0
    %86 = vmatprep.subr.mxu0 0.0
    %87 = vmatpush1.msra.mxu0 0.0
    %88 = vmatprep.subr.mxu0 0.0
    %89 = vmatpush1.msra.mxu0 0.0
    %90 = vmatprep.subr.mxu0 0.0
    %91 = vmatpush1.msra.mxu0 0.0
    %92 = vmatprep.subr.mxu0 0.0
    %93 = vmatpush1.msra.mxu0 0.0
    %94 = vmatprep.subr.mxu0 0.0
    %95 = vmatpush1.msra.mxu0 0.0
    %96 = vmatprep.subr.mxu0 0.0
    %97 = vmatpush1.msra.mxu0 0.0
    %98 = vmatprep.subr.mxu0 0.0
    %99 = vmatpush1.msra.mxu0 0.0
    %100 = vmatprep.subr.mxu0 0.0
    %101 = vmatpush1.msra.mxu0 0.0
    %102 = vmatprep.subr.mxu0 0.0
    %103 = vmatpush1.msra.mxu0 0.0
    %104 = vmatprep.subr.mxu0 0.0
    %105 = vmatpush1.msra.mxu0 0.0
    %106 = vmatprep.subr.mxu0 0.0
    %107 = vmatpush1.msra.mxu0 0.0
    %108 = vmatprep.subr.mxu0 0.0
    %109 = vmatpush1.msra.mxu0 0.0
    %110 = vmatprep.subr.mxu0 0.0
    %111 = vmatpush1.msra.mxu0 0.0
    %112 = vmatprep.subr.mxu0 0.0
    %113 = vmatpush1.msra.mxu0 0.0
    %114 = vmatprep.subr.mxu0 0.0
    %115 = vmatpush1.msra.mxu0 0.0
    %116 = vmatprep.subr.mxu0 0.0
    %117 = vmatpush1.msra.mxu0 0.0
    %118 = vmatprep.subr.mxu0 0.0
    %119 = vmatpush1.msra.mxu0 0.0
    %120 = vmatprep.subr.mxu0 0.0
    %121 = vmatpush1.msra.mxu0 0.0
    %122 = vmatprep.subr.mxu0 0.0
    %123 = vmatpush1.msra.mxu0 0.0
    %124 = vmatprep.subr.mxu0 0.0
    %125 = vmatpush1.msra.mxu0 0.0
    %126 = vmatprep.subr.mxu0 0.0
    %127 = vmatpush1.msra.mxu0 0.0
    %128 = vmatprep.subr.mxu0 0.0
    %129 = vmatpush1.msra.mxu0 0.0
    %130 = vmatprep.subr.mxu0 0.0
    %131 = vmatpush1.msra.mxu0 0.0
    %132 = vmatprep.subr.mxu0 0.0
    %133 = vmatpush1.msra.mxu0 0.0
    %134 = vmatprep.subr.mxu0 0.0
    %135 = vmatpush1.msra.mxu0 0.0
    %136 = vmatprep.subr.mxu0 0.0
    %137 = vmatpush1.msra.mxu0 0.0
    %138 = vmatprep.mubr.f32.mxu0 0.0
    %139 = vmatmul.mubr.f32.gmra.mrb[0].mxu0 %v69
    %v140 = vpop.f32.mrb[0].mxu0
    %v141 = vadd.f32 %v61, %v140
    %v142 = vpop.f32.mrb[0].mxu0
    %143 = vmatprep.mubr.f32.mxu0 0.0
    %144 = vmatmul.mubr.f32.gmra.mrb[0].mxu0 %v72
    %v145 = vpop.f32.mrb[0].mxu0
    %v146 = vadd.f32 %v62, %v145
    %v147 = vpop.f32.mrb[0].mxu0
    %148 = vdwg.mxu0
    %v149 = vtanh.pop %v141
    %v150 = vtanh.pop %v146
    %v151 = vld [vmem:[%s3] sm:$0x1]
    %v153 = vlaneseq
    %v154 = vshrl.u32 %v153, 7
    %v155 = vsub.s32 0, %v154
    %v156 = vrot.slane %v151, %v155
    %v158 = vmul.f32 %v149, %v156
    %v159 = vmul.f32 %v150, %v156
    %v160 = vsel %vm67, %v158, 0.0
    %161 = vadd.xlane.f32.xlu0 %v160
    %v162 = vpop.xlane.xlu0 %161
    %v163 = vsel %vm67, %v159, 0.0
    %164 = vadd.xlane.f32.xlu0 %v163
    %v165 = vpop.xlane.xlu0 %164
    %v168 = vlaneseq
    %v169 = vand.u32 %v168, 127
    %v170 = vlaneseq
    %v171 = vshrl.u32 %v170, 7
    %v172 = vsub.s32 %v169, %v171
    %v173 = vrot.slane %v162, %v172
    %v174 = vlaneseq
    %v175 = vshrl.u32 %v174, 7
    %v176 = vsub.s32 %v169, %v175
    %v177 = vrot.slane %v165, %v176
    %vm178 = vcmask 1041409
    %v179 = vsel %vm178, %v177, %v173
    %vm181 = vcmask 58368
    %v182 = vsel %vm181, %v179, -inf
    %183 = vmax.xlane.f32.xlu0 %v182
    %v184 = vpop.xlane.xlu0 %183
    %v186 = vlaneseq
    %v187 = vshrl.u32 %v186, 7
    %v188 = vsub.s32 0, %v187
    %v189 = vrot.slane %v184, %v188
    %v190 = vlaneseq
    %v191 = vshrl.u32 %v190, 7
    %v192 = vsub.s32 1, %v191
    %v193 = vrot.slane %v184, %v192
    %v196 = vsub.f32 %v162, %v189
    %v197 = vsub.f32 %v165, %v193
    %v198 = vmul.f32 %v196, 1.442695
    %v199 = vpow.pop %v198
    %v200 = vmul.f32 %v197, 1.442695
    %v201 = vpow.pop %v200
    %204 = vset.pattern.permute.xlu0 0
    %205 = vperm.xlu0 %204, %v199
    %v206 = vpop.permute.xlu0 %205
    %207 = vset.pattern.permute.xlu0 0
    %208 = vperm.xlu0 %207, %v201
    %v209 = vpop.permute.xlu0 %208
    %v210 = vlaneseq
    %v211 = vshrl.u32 %v210, 7
    %v212 = vsub.s32 %v169, %v211
    %v213 = vrot.slane %v206, %v212
    %v214 = vlaneseq
    %v215 = vshrl.u32 %v214, 7
    %v216 = vsub.s32 %v169, %v215
    %v217 = vrot.slane %v209, %v216
    %v218 = vsel %vm178, %v217, %v213
    %v220 = vsel %vm181, %v218, 0.0
    %221 = vadd.xlane.f32.xlu0 %v220
    %v222 = vpop.xlane.xlu0 %221
    %v223 = vrcp.pop %v222
    %v225 = vlaneseq
    %v226 = vshrl.u32 %v225, 7
    %v227 = vsub.s32 0, %v226
    %v228 = vrot.slane %v223, %v227
    %v229 = vlaneseq
    %v230 = vshrl.u32 %v229, 7
    %v231 = vsub.s32 1, %v230
    %v232 = vrot.slane %v223, %v231
    %v235 = vmul.f32 %v199, %v228
    %v236 = vmul.f32 %v201, %v232
    %239 = vset.pattern.permute.xlu0 0
    %240 = vperm.xlu0 %239, %v235
    %v241 = vpop.permute.xlu0 %240
    %242 = vset.pattern.permute.xlu0 0
    %243 = vperm.xlu0 %242, %v236
    %v244 = vpop.permute.xlu0 %243
    %v245 = vlaneseq
    %v246 = vshrl.u32 %v245, 7
    %v247 = vsub.s32 %v169, %v246
    %v248 = vrot.slane %v241, %v247
    %v249 = vlaneseq
    %v250 = vshrl.u32 %v249, 7
    %v251 = vsub.s32 %v169, %v250
    %v252 = vrot.slane %v244, %v251
    %v253 = vsel %vm178, %v252, %v248
    %255 = vst.msk [vmem:[#allocation8] sm:$0x3] %vm181, %v253
    // Predicated region
    $region30: #{tpu_custom_call.1} parent=1 // pred_check
      _
    $region31: #{tpu_custom_call.1} parent=1 // pred_check_branch
      %257 = sbr.rel (0) target = $region33
    $region32: #{tpu_custom_call.1} parent=1 // pred_region
      %s259 = ssub.s32 32, 32
      %260 = vsyncadd [#allocation4], %s259
      %s262 = sshll.u32 [#allocation8], 4
      %s263 = int_to_ptr.vmem [resolvable:$true] %s262
      %265 = dma.vmem_to_hbm [thread:$0]  %s263, 32, %s4, [#allocation4]
    $region33: #{tpu_custom_call.1} parent=1 // pred_fallthru
      _
    // Predicated region
    $region34: #{tpu_custom_call.1} parent=1 // pred_check
      _
    $region35: #{tpu_custom_call.1} parent=1 // pred_check_branch
      %267 = sbr.rel (0) target = $region37
    $region36: #{tpu_custom_call.1} parent=1 // pred_region
      %268 = dma.done [#allocation4], 32
    $region37: #{tpu_custom_call.1} parent=1 // pred_fallthru
      _
    %269 = vsyncpa [#allocation3], 1
    %270 = vsyncpa [#allocation6], 1
    %271 = vsyncpa [#allocation4], 1

</llo_original>
